<compile_context>
chip_gen: v7x
topology: tpu7x:2x2x1
jax: 0.10.0
libtpu: 0.0.40
codegen_flags: <defaults>
</compile_context>

<pallas_src>
import jax
import jax.numpy as jnp
from jax.experimental import pallas as pl
from jax.experimental.pallas import tpu as pltpu

_MAX_BATCH_TILE = 4096


def _round_up(a: int, b: int) -> int:
    return (a + b - 1) // b * b


def _sublane_multiple(dtype) -> int:
    # f32 -> 8 sublanes, bf16 -> 16, int8/fp8 -> 32 (sub-32-bit packs sublanes).
    return 8 * max(1, 4 // jnp.dtype(dtype).itemsize)


def _tpu_limits():
    """(physical VMEM bytes, TensorCores per chip) with safe fallbacks."""
    vmem_cap = 128 << 20
    num_cores = 1
    try:
        info = pltpu.get_tpu_info()
        vmem_cap = int(getattr(info, "vmem_capacity_bytes", vmem_cap))
        for attr in ("num_cores", "tensorcores_per_chip", "cores_per_chip"):
            v = getattr(info, attr, None)
            if v:
                num_cores = int(v)
                break
    except Exception:
        pass
    # v7x is the only listed generation with 64 MiB VMEM per TC; it has 2 TCs.
    if num_cores == 1 and vmem_cap <= (64 << 20):
        num_cores = 2
    return vmem_cap, max(1, num_cores)


def _param_spec(shape, single_buffer):
    """BlockSpec for a weight/bias: constant index_map (fetched once).

    When parameters are large, request single-buffering so we don't pay 2x
    parameter VMEM (matters on v7x's 64 MiB VMEM).  Falls back gracefully if
    this jax version's BlockSpec has no pipeline_mode."""
    idx = lambda i: (0,) * len(shape)
    if single_buffer:
        try:
            return pl.BlockSpec(shape, idx, pipeline_mode=pl.Buffered(1))
        except (TypeError, AttributeError):
            pass
    return pl.BlockSpec(shape, idx)


def output_module_kernel(x_ref, w1_ref, b1_ref, w2_ref, b2_ref, o_ref):
    """Fused MLP forward: o = relu(x @ W1 + b1) @ W2 + b2 (f32 accumulation)."""
    x = x_ref[...]  # keep input dtype: bf16 inputs stay bf16 -> full-rate MXU
    # Layer 0: Linear(n_in -> n_hidden), f32 accumulation on the MXU.
    # (Default precision: bf16 MXU passes for f32 operands; pass an explicit
    # precision here if exact f32 parity is required at large feature dims.)
    h = jnp.dot(x, w1_ref[...], preferred_element_type=jnp.float32)
    # Layer 1: bias + ReLU in f32 on the VPU.
    h = jnp.maximum(h + b1_ref[...].astype(jnp.float32), 0.0)
    # Back to the activation dtype so bf16 models hit the bf16 MXU path for
    # layer 2 as well (no-op for f32 models).
    h = h.astype(x_ref.dtype)
    # Layer 2: Linear(n_hidden -> n_out), no final activation.
    o = jnp.dot(h, w2_ref[...], preferred_element_type=jnp.float32)
    o_ref[...] = (o + b2_ref[...].astype(jnp.float32)).astype(o_ref.dtype)


def output_module_forward(x, w1, b1, w2, b2, *, batch_tile=None):
    """Run the fused OutputModule MLP with Pallas.

    x : [B, n_in]
    w1: [n_in, n_hidden],  b1: [1, n_hidden]
    w2: [n_hidden, n_out], b2: [1, n_out]
    returns [B, n_out]
    """
    B, n_in = x.shape
    n_hidden = w1.shape[1]
    n_out = w2.shape[1]
    itemsize = jnp.dtype(x.dtype).itemsize
    sub = _sublane_multiple(x.dtype)

    vmem_cap, num_cores = _tpu_limits()
    budget = int(vmem_cap) * 3 // 4            # generation-aware cap (~75% physical)

    param_bytes = w1.nbytes + b1.nbytes + w2.nbytes + b2.nbytes
    single_buffer_params = param_bytes > (8 << 20)   # only worth it at real widths
    param_foot = param_bytes * (1 if single_buffer_params else 2)

    # VMEM bytes per batch row: double-buffered x/out tiles + the f32 hidden
    # activation and its cast-back copy held live between the two matmuls.
    per_row = (2 * n_in * itemsize + 2 * n_out * itemsize
               + n_hidden * 4 + n_hidden * itemsize)

    # ---- batch tile: the largest tile the VMEM budget admits; only constrain
    # the tile count on multi-core chips (v7x) so "parallel" can shard it. ----
    if batch_tile is None:
        avail = budget - param_foot - (2 << 20)          # headroom for scratch
        max_tile = max(sub, min(_MAX_BATCH_TILE, avail // per_row) // sub * sub)
        if num_cores > 1:
            per_core = _round_up(pl.cdiv(B, num_cores), sub)
            batch_tile = min(max_tile, per_core)
        else:
            batch_tile = min(max_tile, _round_up(B, sub))
    else:
        batch_tile = min(int(batch_tile), B)
        if batch_tile < B:
            batch_tile = max(sub, batch_tile // sub * sub)
    if batch_tile >= B:
        batch_tile = B          # single full-batch block (block == array dim)

    grid = (pl.cdiv(B, batch_tile),)   # ragged tail handled by a partial block

    needed = (param_foot
              + 2 * batch_tile * (n_in + n_out) * itemsize
              + batch_tile * n_hidden * (4 + itemsize))
    vmem_limit = int(min(budget, max(2 * needed, 8 << 20)))

    cost = pl.CostEstimate(
        flops=2 * B * (n_in * n_hidden + n_hidden * n_out),
        transcendentals=0,
        bytes_accessed=x.nbytes + param_bytes + B * n_out * itemsize,
    )

    return pl.pallas_call(
        output_module_kernel,
        out_shape=jax.ShapeDtypeStruct((B, n_out), x.dtype),
        grid_spec=pltpu.PrefetchScalarGridSpec(
            num_scalar_prefetch=0,
            grid=grid,
            in_specs=[
                # batch-tiled activations (double-buffered across the grid)
                pl.BlockSpec((batch_tile, n_in), lambda i: (i, 0)),
                # weights / biases: full arrays, same block every iteration
                _param_spec((n_in, n_hidden), single_buffer_params),
                _param_spec((1, n_hidden), single_buffer_params),
                _param_spec((n_hidden, n_out), single_buffer_params),
                _param_spec((1, n_out), single_buffer_params),
            ],
            out_specs=pl.BlockSpec((batch_tile, n_out), lambda i: (i, 0)),
        ),
        compiler_params=pltpu.CompilerParams(
            dimension_semantics=("parallel",),
            vmem_limit_bytes=vmem_limit,
        ),
        cost_estimate=cost,
    )(x, w1, b1, w2, b2)


def reference_forward(x, w1, b1, w2, b2):
    h = jnp.maximum(x @ w1 + b1, 0.0)
    return h @ w2 + b2


if __name__ == "__main__":
    # Shapes consistent with the module: decoder hidden -> out_features.
    batch = 256
    n_in = 32       # output dim of the decoder feeding this module
    n_hidden = 64   # hidden width of the fc ModuleList
    n_out = 16      # out_features of the OutputModule

    key = jax.random.PRNGKey(0)
    kx, kw1, kb1, kw2, kb2 = jax.random.split(key, 5)

    x = jax.random.normal(kx, (batch, n_in), dtype=jnp.float32)
    # Deterministic PyTorch-Linear-style init (uniform in +/- 1/sqrt(fan_in)).
    bound1 = 1.0 / n_in ** 0.5
    bound2 = 1.0 / n_hidden ** 0.5
    w1 = jax.random.uniform(kw1, (n_in, n_hidden), jnp.float32, -bound1, bound1)
    b1 = jax.random.uniform(kb1, (1, n_hidden), jnp.float32, -bound1, bound1)
    w2 = jax.random.uniform(kw2, (n_hidden, n_out), jnp.float32, -bound2, bound2)
    b2 = jax.random.uniform(kb2, (1, n_out), jnp.float32, -bound2, bound2)

    ref = reference_forward(x, w1, b1, w2, b2)

    # 1) default tiling (largest VMEM-admissible tile / per-core shards).
    out = jax.block_until_ready(output_module_forward(x, w1, b1, w2, b2))
    assert out.shape == (batch, n_out)
    assert jnp.allclose(out, ref, atol=1e-5, rtol=1e-5)

    # 2) ragged grid: force a small tile so the last block is partial
    #    (exercises the no-padding cdiv path; OOB rows are dropped on store).
    out2 = jax.block_until_ready(
        output_module_forward(x[:200], w1, b1, w2, b2, batch_tile=96))
    assert out2.shape == (200, n_out)
    assert jnp.allclose(out2, ref[:200], atol=1e-5, rtol=1e-5)

    print("KERNEL_OK")
</pallas_src>

<mosaic_0001>
module attributes {stable_mosaic.version = 11 : i64} {
  func.func @output_module_kernel(%arg0: i32, %arg1: memref<256x32xf32, #tpu.memory_space<vmem>>, %arg2: memref<32x64xf32, #tpu.memory_space<vmem>>, %arg3: memref<1x64xf32, #tpu.memory_space<vmem>>, %arg4: memref<64x16xf32, #tpu.memory_space<vmem>>, %arg5: memref<1x16xf32, #tpu.memory_space<vmem>>, %arg6: memref<256x16xf32, #tpu.memory_space<vmem>>) attributes {dimension_semantics = [#tpu.dimension_semantics<parallel>], iteration_bounds = array<i64: 1>, scalar_prefetch = 0 : i64, scratch_operands = 0 : i64, tpu.core_type = #tpu.core_type<tc>, window_params = [{transform_indices = @transform_0, window_bounds = array<i64: 256, 32>}, {pipeline_mode = #tpu.pipeline_mode<synchronous>, transform_indices = @transform_1, window_bounds = array<i64: 32, 64>}, {pipeline_mode = #tpu.pipeline_mode<synchronous>, transform_indices = @transform_2, window_bounds = array<i64: 1, 64>}, {pipeline_mode = #tpu.pipeline_mode<synchronous>, transform_indices = @transform_3, window_bounds = array<i64: 64, 16>}, {pipeline_mode = #tpu.pipeline_mode<synchronous>, transform_indices = @transform_4, window_bounds = array<i64: 1, 16>}, {transform_indices = @transform_5, window_bounds = array<i64: 256, 16>}]} {
    %c0 = arith.constant 0 : index
    %c0_0 = arith.constant 0 : index
    %0 = vector.load %arg1[%c0, %c0_0] : memref<256x32xf32, #tpu.memory_space<vmem>>, vector<256x32xf32>
    %c0_1 = arith.constant 0 : index
    %c0_2 = arith.constant 0 : index
    %1 = vector.load %arg2[%c0_1, %c0_2] : memref<32x64xf32, #tpu.memory_space<vmem>>, vector<32x64xf32>
    %cst = arith.constant dense<0.000000e+00> : vector<256x64xf32>
    %2 = tpu.matmul %0, %1, %cst {dimension_numbers = #tpu.dot_dimension_numbers<[1], [0], [0], [1], [0, 0, 1, 1], [], []>} : vector<256x32xf32>, vector<32x64xf32>, vector<256x64xf32> -> vector<256x64xf32>
    %c0_3 = arith.constant 0 : index
    %c0_4 = arith.constant 0 : index
    %3 = vector.load %arg3[%c0_3, %c0_4] : memref<1x64xf32, #tpu.memory_space<vmem>>, vector<1x64xf32>
    %4 = vector.broadcast %3 : vector<1x64xf32> to vector<256x64xf32>
    %5 = arith.addf %2, %4 : vector<256x64xf32>
    %cst_5 = arith.constant 0.000000e+00 : f32
    %6 = vector.broadcast %cst_5 : f32 to vector<256x64xf32>
    %7 = arith.maximumf %5, %6 : vector<256x64xf32>
    %c0_6 = arith.constant 0 : index
    %c0_7 = arith.constant 0 : index
    %8 = vector.load %arg4[%c0_6, %c0_7] : memref<64x16xf32, #tpu.memory_space<vmem>>, vector<64x16xf32>
    %cst_8 = arith.constant dense<0.000000e+00> : vector<256x16xf32>
    %9 = tpu.matmul %7, %8, %cst_8 {dimension_numbers = #tpu.dot_dimension_numbers<[1], [0], [0], [1], [0, 0, 1, 1], [], []>} : vector<256x64xf32>, vector<64x16xf32>, vector<256x16xf32> -> vector<256x16xf32>
    %c0_9 = arith.constant 0 : index
    %c0_10 = arith.constant 0 : index
    %10 = vector.load %arg5[%c0_9, %c0_10] : memref<1x16xf32, #tpu.memory_space<vmem>>, vector<1x16xf32>
    %11 = vector.broadcast %10 : vector<1x16xf32> to vector<256x16xf32>
    %12 = arith.addf %9, %11 : vector<256x16xf32>
    %c0_11 = arith.constant 0 : index
    %c0_12 = arith.constant 0 : index
    %13 = vector.load %arg6[%c0_11, %c0_12] : memref<256x16xf32, #tpu.memory_space<vmem>>, vector<256x16xf32>
    tpu.vector_store %arg6[%c0_11, %c0_12], %12 {strides = array<i32>} : memref<256x16xf32, #tpu.memory_space<vmem>>, vector<256x16xf32>,
    return
  }
  func.func @transform_0(%arg0: i32) -> (i32, i32) {
    %c0_i32 = arith.constant 0 : i32
    %c0_i32_0 = arith.constant 0 : i32
    return %arg0, %c0_i32 : i32, i32
  }
  func.func @transform_1(%arg0: i32) -> (i32, i32) {
    %c0_i32 = arith.constant 0 : i32
    %c0_i32_0 = arith.constant 0 : i32
    %c0_i32_1 = arith.constant 0 : i32
    return %c0_i32, %c0_i32_0 : i32, i32
  }
  func.func @transform_2(%arg0: i32) -> (i32, i32) {
    %c0_i32 = arith.constant 0 : i32
    %c0_i32_0 = arith.constant 0 : i32
    %c0_i32_1 = arith.constant 0 : i32
    return %c0_i32, %c0_i32_0 : i32, i32
  }
  func.func @transform_3(%arg0: i32) -> (i32, i32) {
    %c0_i32 = arith.constant 0 : i32
    %c0_i32_0 = arith.constant 0 : i32
    %c0_i32_1 = arith.constant 0 : i32
    return %c0_i32, %c0_i32_0 : i32, i32
  }
  func.func @transform_4(%arg0: i32) -> (i32, i32) {
    %c0_i32 = arith.constant 0 : i32
    %c0_i32_0 = arith.constant 0 : i32
    %c0_i32_1 = arith.constant 0 : i32
    return %c0_i32, %c0_i32_0 : i32, i32
  }
  func.func @transform_5(%arg0: i32) -> (i32, i32) {
    %c0_i32 = arith.constant 0 : i32
    %c0_i32_0 = arith.constant 0 : i32
    return %arg0, %c0_i32 : i32, i32
  }
}

</mosaic_0001>

<llo_original>
// kernel: tpu_custom_call.1
$region0: #{tpu_custom_call.1}
  #allocation0 [shape = 'u32[]', space=smem, size = 0x4, offset = 0x4, fixed_abs, tag = 'smem constant byte address 0x4 - core index']
  #allocation1 [shape = 'u32[144,128]{1,0:T(1,128)}', space=vmem, size = 0x12000, scoped, tag = 'internal scratch']
  %s0 = inlined_call_operand.vmem [shape: f32[256,32], index: 0, kind: input, shape index: {}]
  %s1 = inlined_call_operand.vmem [shape: f32[32,64], index: 1, kind: input, shape index: {}]
  %s2 = inlined_call_operand.vmem [shape: f32[1,64], index: 2, kind: input, shape index: {}]
  %s3 = inlined_call_operand.vmem [shape: f32[64,16], index: 3, kind: input, shape index: {}]
  %s4 = inlined_call_operand.vmem [shape: f32[1,16], index: 4, kind: input, shape index: {}]
  %s5 = inlined_call_operand.vmem [shape: f32[256,16], index: 5, kind: output, shape index: {}]
  %s6 = sld [smem:[#allocation0]]
  $region30: #{tpu_custom_call.1} parent=0
    _
  %s8 = ssub.s32 1, %s6
  %s9 = scalar_select 0, %s8, %s6
  // Predicated region
  $region2: #{tpu_custom_call.1} parent=0 // pred_check
    _
  $region3: #{tpu_custom_call.1} parent=0 // pred_check_branch
    %11 = sbr.rel (0) target = $region5
  $region4: #{tpu_custom_call.1} parent=0 // pred_region
    _
  $region5: #{tpu_custom_call.1} parent=0 // pred_fallthru
    _
  // Predicated region
  $region6: #{tpu_custom_call.1} parent=0 // pred_check
    _
  $region7: #{tpu_custom_call.1} parent=0 // pred_check_branch
    %13 = sbr.rel (0) target = $region9
  $region8: #{tpu_custom_call.1} parent=0 // pred_region
    _
  $region9: #{tpu_custom_call.1} parent=0 // pred_fallthru
    _
  // Predicated region
  $region10: #{tpu_custom_call.1} parent=0 // pred_check
    _
  $region11: #{tpu_custom_call.1} parent=0 // pred_check_branch
    %15 = sbr.rel (0) target = $region13
  $region12: #{tpu_custom_call.1} parent=0 // pred_region
    _
  $region13: #{tpu_custom_call.1} parent=0 // pred_fallthru
    _
  // Predicated region
  $region14: #{tpu_custom_call.1} parent=0 // pred_check
    _
  $region15: #{tpu_custom_call.1} parent=0 // pred_check_branch
    %17 = sbr.rel (0) target = $region17
  $region16: #{tpu_custom_call.1} parent=0 // pred_region
    _
  $region17: #{tpu_custom_call.1} parent=0 // pred_fallthru
    _
  // Predicated region
  $region18: #{tpu_custom_call.1} parent=0 // pred_check
    _
  $region19: #{tpu_custom_call.1} parent=0 // pred_check_branch
    %19 = sbr.rel (0) target = $region21
  $region20: #{tpu_custom_call.1} parent=0 // pred_region
    _
  $region21: #{tpu_custom_call.1} parent=0 // pred_fallthru
    _
  %v20 = vld [vmem:[%s0] sm:$0xff]
  %v21 = vld [vmem:[%s0 + $0x8] sm:$0xff]
  %v22 = vld [vmem:[%s0 + $0x10] sm:$0xff]
  %v23 = vld [vmem:[%s0 + $0x18] sm:$0xff]
  %v24 = vld [vmem:[%s0 + $0x20] sm:$0xff]
  %v25 = vld [vmem:[%s0 + $0x28] sm:$0xff]
  %v26 = vld [vmem:[%s0 + $0x30] sm:$0xff]
  %v27 = vld [vmem:[%s0 + $0x38] sm:$0xff]
  %v28 = vld [vmem:[%s0 + $0x40] sm:$0xff]
  %v29 = vld [vmem:[%s0 + $0x48] sm:$0xff]
  %v30 = vld [vmem:[%s0 + $0x50] sm:$0xff]
  %v31 = vld [vmem:[%s0 + $0x58] sm:$0xff]
  %v32 = vld [vmem:[%s0 + $0x60] sm:$0xff]
  %v33 = vld [vmem:[%s0 + $0x68] sm:$0xff]
  %v34 = vld [vmem:[%s0 + $0x70] sm:$0xff]
  %v35 = vld [vmem:[%s0 + $0x78] sm:$0xff]
  %v36 = vld [vmem:[%s0 + $0x80] sm:$0xff]
  %v37 = vld [vmem:[%s0 + $0x88] sm:$0xff]
  %v38 = vld [vmem:[%s0 + $0x90] sm:$0xff]
  %v39 = vld [vmem:[%s0 + $0x98] sm:$0xff]
  %v40 = vld [vmem:[%s0 + $0xa0] sm:$0xff]
  %v41 = vld [vmem:[%s0 + $0xa8] sm:$0xff]
  %v42 = vld [vmem:[%s0 + $0xb0] sm:$0xff]
  %v43 = vld [vmem:[%s0 + $0xb8] sm:$0xff]
  %v44 = vld [vmem:[%s0 + $0xc0] sm:$0xff]
  %v45 = vld [vmem:[%s0 + $0xc8] sm:$0xff]
  %v46 = vld [vmem:[%s0 + $0xd0] sm:$0xff]
  %v47 = vld [vmem:[%s0 + $0xd8] sm:$0xff]
  %v48 = vld [vmem:[%s0 + $0xe0] sm:$0xff]
  %v49 = vld [vmem:[%s0 + $0xe8] sm:$0xff]
  %v50 = vld [vmem:[%s0 + $0xf0] sm:$0xff]
  %v51 = vld [vmem:[%s0 + $0xf8] sm:$0xff]
  %v52 = vld [vmem:[%s1] sm:$0xff]
  %v53 = vld [vmem:[%s1 + $0x8] sm:$0xff]
  %v54 = vld [vmem:[%s1 + $0x10] sm:$0xff]
  %v55 = vld [vmem:[%s1 + $0x18] sm:$0xff]
  %v56 = vld [vmem:[%s2] sm:$0x1]
  %v58 = vlaneseq
  %v59 = vshrl.u32 %v58, 7
  %v60 = vsub.s32 0, %v59
  %v61 = vrot.slane %v56, %v60
  %vm63 = vcmask 261120
  %v65 = vsel %vm63, %v20, 0
  %v68 = vsel %vm63, %v21, 0
  %v71 = vsel %vm63, %v22, 0
  %v74 = vsel %vm63, %v23, 0
  %v77 = vsel %vm63, %v24, 0
  %v80 = vsel %vm63, %v25, 0
  %v83 = vsel %vm63, %v26, 0
  %v86 = vsel %vm63, %v27, 0
  %v89 = vsel %vm63, %v28, 0
  %v92 = vsel %vm63, %v29, 0
  %v95 = vsel %vm63, %v30, 0
  %v98 = vsel %vm63, %v31, 0
  %v101 = vsel %vm63, %v32, 0
  %v104 = vsel %vm63, %v33, 0
  %v107 = vsel %vm63, %v34, 0
  %v110 = vsel %vm63, %v35, 0
  %v113 = vsel %vm63, %v36, 0
  %v116 = vsel %vm63, %v37, 0
  %v119 = vsel %vm63, %v38, 0
  %v122 = vsel %vm63, %v39, 0
  %v125 = vsel %vm63, %v40, 0
  %v128 = vsel %vm63, %v41, 0
  %v131 = vsel %vm63, %v42, 0
  %v134 = vsel %vm63, %v43, 0
  %v137 = vsel %vm63, %v44, 0
  %v140 = vsel %vm63, %v45, 0
  %v143 = vsel %vm63, %v46, 0
  %v146 = vsel %vm63, %v47, 0
  %v149 = vsel %vm63, %v48, 0
  %v152 = vsel %vm63, %v49, 0
  %v155 = vsel %vm63, %v50, 0
  %v158 = vsel %vm63, %v51, 0
  %160 = vmatprep.subr.mxu0 0.0
  %161 = vmatpush1.msra.mxu0 %v52
  %162 = vmatprep.subr.mxu0 0.0
  %163 = vmatpush1.msra.mxu0 %v53
  %164 = vmatprep.subr.mxu0 0.0
  %165 = vmatpush1.msra.mxu0 %v54
  %166 = vmatprep.subr.mxu0 0.0
  %167 = vmatpush1.msra.mxu0 %v55
  %168 = vmatprep.subr.mxu0 0.0
  %169 = vmatpush1.msra.mxu0 0.0
  %170 = vmatprep.subr.mxu0 0.0
  %171 = vmatpush1.msra.mxu0 0.0
  %172 = vmatprep.subr.mxu0 0.0
  %173 = vmatpush1.msra.mxu0 0.0
  %174 = vmatprep.subr.mxu0 0.0
  %175 = vmatpush1.msra.mxu0 0.0
  %176 = vmatprep.subr.mxu0 0.0
  %177 = vmatpush1.msra.mxu0 0.0
  %178 = vmatprep.subr.mxu0 0.0
  %179 = vmatpush1.msra.mxu0 0.0
  %180 = vmatprep.subr.mxu0 0.0
  %181 = vmatpush1.msra.mxu0 0.0
  %182 = vmatprep.subr.mxu0 0.0
  %183 = vmatpush1.msra.mxu0 0.0
  %184 = vmatprep.subr.mxu0 0.0
  %185 = vmatpush1.msra.mxu0 0.0
  %186 = vmatprep.subr.mxu0 0.0
  %187 = vmatpush1.msra.mxu0 0.0
  %188 = vmatprep.subr.mxu0 0.0
  %189 = vmatpush1.msra.mxu0 0.0
  %190 = vmatprep.subr.mxu0 0.0
  %191 = vmatpush1.msra.mxu0 0.0
  %192 = vmatprep.subr.mxu0 0.0
  %193 = vmatpush1.msra.mxu0 0.0
  %194 = vmatprep.subr.mxu0 0.0
  %195 = vmatpush1.msra.mxu0 0.0
  %196 = vmatprep.subr.mxu0 0.0
  %197 = vmatpush1.msra.mxu0 0.0
  %198 = vmatprep.subr.mxu0 0.0
  %199 = vmatpush1.msra.mxu0 0.0
  %200 = vmatprep.subr.mxu0 0.0
  %201 = vmatpush1.msra.mxu0 0.0
  %202 = vmatprep.subr.mxu0 0.0
  %203 = vmatpush1.msra.mxu0 0.0
  %204 = vmatprep.subr.mxu0 0.0
  %205 = vmatpush1.msra.mxu0 0.0
  %206 = vmatprep.subr.mxu0 0.0
  %207 = vmatpush1.msra.mxu0 0.0
  %208 = vmatprep.subr.mxu0 0.0
  %209 = vmatpush1.msra.mxu0 0.0
  %210 = vmatprep.subr.mxu0 0.0
  %211 = vmatpush1.msra.mxu0 0.0
  %212 = vmatprep.subr.mxu0 0.0
  %213 = vmatpush1.msra.mxu0 0.0
  %214 = vmatprep.subr.mxu0 0.0
  %215 = vmatpush1.msra.mxu0 0.0
  %216 = vmatprep.subr.mxu0 0.0
  %217 = vmatpush1.msra.mxu0 0.0
  %218 = vmatprep.subr.mxu0 0.0
  %219 = vmatpush1.msra.mxu0 0.0
  %220 = vmatprep.subr.mxu0 0.0
  %221 = vmatpush1.msra.mxu0 0.0
  %222 = vmatprep.subr.mxu0 0.0
  %223 = vmatpush1.msra.mxu0 0.0
  %224 = vmatprep.mubr.f32.mxu0 0.0
  %225 = vmatmul.mubr.f32.gmra.mrb[0].mxu0 %v65
  %v226 = vpop.f32.mrb[0].mxu0
  %v227 = vadd.f32 %v61, %v226
  %v228 = vpop.f32.mrb[0].mxu0
  %229 = vmatprep.mubr.f32.mxu0 0.0
  %230 = vmatmul.mubr.f32.gmra.mrb[0].mxu0 %v68
  %v231 = vpop.f32.mrb[0].mxu0
  %v232 = vadd.f32 %v61, %v231
  %v233 = vpop.f32.mrb[0].mxu0
  %234 = vmatprep.mubr.f32.mxu0 0.0
  %235 = vmatmul.mubr.f32.gmra.mrb[0].mxu0 %v71
  %v236 = vpop.f32.mrb[0].mxu0
  %v237 = vadd.f32 %v61, %v236
  %v238 = vpop.f32.mrb[0].mxu0
  %239 = vmatprep.mubr.f32.mxu0 0.0
  %240 = vmatmul.mubr.f32.gmra.mrb[0].mxu0 %v74
  %v241 = vpop.f32.mrb[0].mxu0
  %v242 = vadd.f32 %v61, %v241
  %v243 = vpop.f32.mrb[0].mxu0
  %244 = vmatprep.mubr.f32.mxu0 0.0
  %245 = vmatmul.mubr.f32.gmra.mrb[0].mxu0 %v77
  %v246 = vpop.f32.mrb[0].mxu0
  %v247 = vadd.f32 %v61, %v246
  %v248 = vpop.f32.mrb[0].mxu0
  %249 = vmatprep.mubr.f32.mxu0 0.0
  %250 = vmatmul.mubr.f32.gmra.mrb[0].mxu0 %v80
  %v251 = vpop.f32.mrb[0].mxu0
  %v252 = vadd.f32 %v61, %v251
  %v253 = vpop.f32.mrb[0].mxu0
  %254 = vmatprep.mubr.f32.mxu0 0.0
  %255 = vmatmul.mubr.f32.gmra.mrb[0].mxu0 %v83
  %v256 = vpop.f32.mrb[0].mxu0
  %v257 = vadd.f32 %v61, %v256
  %v258 = vpop.f32.mrb[0].mxu0
  %259 = vmatprep.mubr.f32.mxu0 0.0
  %260 = vmatmul.mubr.f32.gmra.mrb[0].mxu0 %v86
  %v261 = vpop.f32.mrb[0].mxu0
  %v262 = vadd.f32 %v61, %v261
  %v263 = vpop.f32.mrb[0].mxu0
  %264 = vmatprep.mubr.f32.mxu0 0.0
  %265 = vmatmul.mubr.f32.gmra.mrb[0].mxu0 %v89
  %v266 = vpop.f32.mrb[0].mxu0
  %v267 = vadd.f32 %v61, %v266
  %v268 = vpop.f32.mrb[0].mxu0
  %269 = vmatprep.mubr.f32.mxu0 0.0
  %270 = vmatmul.mubr.f32.gmra.mrb[0].mxu0 %v92
  %v271 = vpop.f32.mrb[0].mxu0
  %v272 = vadd.f32 %v61, %v271
  %v273 = vpop.f32.mrb[0].mxu0
  %274 = vmatprep.mubr.f32.mxu0 0.0
  %275 = vmatmul.mubr.f32.gmra.mrb[0].mxu0 %v95
  %v276 = vpop.f32.mrb[0].mxu0
  %v277 = vadd.f32 %v61, %v276
  %v278 = vpop.f32.mrb[0].mxu0
  %279 = vmatprep.mubr.f32.mxu0 0.0
  %280 = vmatmul.mubr.f32.gmra.mrb[0].mxu0 %v98
  %v281 = vpop.f32.mrb[0].mxu0
  %v282 = vadd.f32 %v61, %v281
  %v283 = vpop.f32.mrb[0].mxu0
  %284 = vmatprep.mubr.f32.mxu0 0.0
  %285 = vmatmul.mubr.f32.gmra.mrb[0].mxu0 %v101
  %v286 = vpop.f32.mrb[0].mxu0
  %v287 = vadd.f32 %v61, %v286
  %v288 = vpop.f32.mrb[0].mxu0
  %289 = vmatprep.mubr.f32.mxu0 0.0
  %290 = vmatmul.mubr.f32.gmra.mrb[0].mxu0 %v104
  %v291 = vpop.f32.mrb[0].mxu0
  %v292 = vadd.f32 %v61, %v291
  %v293 = vpop.f32.mrb[0].mxu0
  %294 = vmatprep.mubr.f32.mxu0 0.0
  %295 = vmatmul.mubr.f32.gmra.mrb[0].mxu0 %v107
  %v296 = vpop.f32.mrb[0].mxu0
  %v297 = vadd.f32 %v61, %v296
  %v298 = vpop.f32.mrb[0].mxu0
  %299 = vmatprep.mubr.f32.mxu0 0.0
  %300 = vmatmul.mubr.f32.gmra.mrb[0].mxu0 %v110
  %v301 = vpop.f32.mrb[0].mxu0
  %v302 = vadd.f32 %v61, %v301
  %v303 = vpop.f32.mrb[0].mxu0
  %304 = vmatprep.mubr.f32.mxu0 0.0
  %305 = vmatmul.mubr.f32.gmra.mrb[0].mxu0 %v113
  %v306 = vpop.f32.mrb[0].mxu0
  %v307 = vadd.f32 %v61, %v306
  %v308 = vpop.f32.mrb[0].mxu0
  %309 = vmatprep.mubr.f32.mxu0 0.0
  %310 = vmatmul.mubr.f32.gmra.mrb[0].mxu0 %v116
  %v311 = vpop.f32.mrb[0].mxu0
  %v312 = vadd.f32 %v61, %v311
  %v313 = vpop.f32.mrb[0].mxu0
  %314 = vmatprep.mubr.f32.mxu0 0.0
  %315 = vmatmul.mubr.f32.gmra.mrb[0].mxu0 %v119
  %v316 = vpop.f32.mrb[0].mxu0
  %v317 = vadd.f32 %v61, %v316
  %v318 = vpop.f32.mrb[0].mxu0
  %319 = vmatprep.mubr.f32.mxu0 0.0
  %320 = vmatmul.mubr.f32.gmra.mrb[0].mxu0 %v122
  %v321 = vpop.f32.mrb[0].mxu0
  %v322 = vadd.f32 %v61, %v321
  %v323 = vpop.f32.mrb[0].mxu0
  %324 = vmatprep.mubr.f32.mxu0 0.0
  %325 = vmatmul.mubr.f32.gmra.mrb[0].mxu0 %v125
  %v326 = vpop.f32.mrb[0].mxu0
  %v327 = vadd.f32 %v61, %v326
  %v328 = vpop.f32.mrb[0].mxu0
  %329 = vmatprep.mubr.f32.mxu0 0.0
  %330 = vmatmul.mubr.f32.gmra.mrb[0].mxu0 %v128
  %v331 = vpop.f32.mrb[0].mxu0
  %v332 = vadd.f32 %v61, %v331
  %v333 = vpop.f32.mrb[0].mxu0
  %334 = vmatprep.mubr.f32.mxu0 0.0
  %335 = vmatmul.mubr.f32.gmra.mrb[0].mxu0 %v131
  %v336 = vpop.f32.mrb[0].mxu0
  %v337 = vadd.f32 %v61, %v336
  %v338 = vpop.f32.mrb[0].mxu0
  %339 = vmatprep.mubr.f32.mxu0 0.0
  %340 = vmatmul.mubr.f32.gmra.mrb[0].mxu0 %v134
  %v341 = vpop.f32.mrb[0].mxu0
  %v342 = vadd.f32 %v61, %v341
  %v343 = vpop.f32.mrb[0].mxu0
  %344 = vmatprep.mubr.f32.mxu0 0.0
  %345 = vmatmul.mubr.f32.gmra.mrb[0].mxu0 %v137
  %v346 = vpop.f32.mrb[0].mxu0
  %v347 = vadd.f32 %v61, %v346
  %v348 = vpop.f32.mrb[0].mxu0
  %349 = vmatprep.mubr.f32.mxu0 0.0
  %350 = vmatmul.mubr.f32.gmra.mrb[0].mxu0 %v140
  %v351 = vpop.f32.mrb[0].mxu0
  %v352 = vadd.f32 %v61, %v351
  %v353 = vpop.f32.mrb[0].mxu0
  %354 = vmatprep.mubr.f32.mxu0 0.0
  %355 = vmatmul.mubr.f32.gmra.mrb[0].mxu0 %v143
  %v356 = vpop.f32.mrb[0].mxu0
  %v357 = vadd.f32 %v61, %v356
  %v358 = vpop.f32.mrb[0].mxu0
  %359 = vmatprep.mubr.f32.mxu0 0.0
  %360 = vmatmul.mubr.f32.gmra.mrb[0].mxu0 %v146
  %v361 = vpop.f32.mrb[0].mxu0
  %v362 = vadd.f32 %v61, %v361
  %v363 = vpop.f32.mrb[0].mxu0
  %364 = vmatprep.mubr.f32.mxu0 0.0
  %365 = vmatmul.mubr.f32.gmra.mrb[0].mxu0 %v149
  %v366 = vpop.f32.mrb[0].mxu0
  %v367 = vadd.f32 %v61, %v366
  %v368 = vpop.f32.mrb[0].mxu0
  %369 = vmatprep.mubr.f32.mxu0 0.0
  %370 = vmatmul.mubr.f32.gmra.mrb[0].mxu0 %v152
  %v371 = vpop.f32.mrb[0].mxu0
  %v372 = vadd.f32 %v61, %v371
  %v373 = vpop.f32.mrb[0].mxu0
  %374 = vmatprep.mubr.f32.mxu0 0.0
  %375 = vmatmul.mubr.f32.gmra.mrb[0].mxu0 %v155
  %v376 = vpop.f32.mrb[0].mxu0
  %v377 = vadd.f32 %v61, %v376
  %v378 = vpop.f32.mrb[0].mxu0
  %379 = vmatprep.mubr.f32.mxu0 0.0
  %380 = vmatmul.mubr.f32.gmra.mrb[0].mxu0 %v158
  %v381 = vpop.f32.mrb[0].mxu0
  %v382 = vadd.f32 %v61, %v381
  %v383 = vpop.f32.mrb[0].mxu0
  %384 = vdwg.mxu0
  %v385 = vmax.f32 %v227, 0.0
  %v386 = vmax.f32 %v232, 0.0
  %v387 = vmax.f32 %v237, 0.0
  %v388 = vmax.f32 %v242, 0.0
  %v389 = vmax.f32 %v247, 0.0
  %v390 = vmax.f32 %v252, 0.0
  %v391 = vmax.f32 %v257, 0.0
  %v392 = vmax.f32 %v262, 0.0
  %v393 = vmax.f32 %v267, 0.0
  %v394 = vmax.f32 %v272, 0.0
  %v395 = vmax.f32 %v277, 0.0
  %v396 = vmax.f32 %v282, 0.0
  %v397 = vmax.f32 %v287, 0.0
  %v398 = vmax.f32 %v292, 0.0
  %v399 = vmax.f32 %v297, 0.0
  %v400 = vmax.f32 %v302, 0.0
  %v401 = vmax.f32 %v307, 0.0
  %v402 = vmax.f32 %v312, 0.0
  %v403 = vmax.f32 %v317, 0.0
  %v404 = vmax.f32 %v322, 0.0
  %v405 = vmax.f32 %v327, 0.0
  %v406 = vmax.f32 %v332, 0.0
  %v407 = vmax.f32 %v337, 0.0
  %v408 = vmax.f32 %v342, 0.0
  %v409 = vmax.f32 %v347, 0.0
  %v410 = vmax.f32 %v352, 0.0
  %v411 = vmax.f32 %v357, 0.0
  %v412 = vmax.f32 %v362, 0.0
  %v413 = vmax.f32 %v367, 0.0
  %v414 = vmax.f32 %v372, 0.0
  %v415 = vmax.f32 %v377, 0.0
  %v416 = vmax.f32 %v382, 0.0
  %v417 = vld [vmem:[%s3] sm:$0xff]
  %v418 = vld [vmem:[%s3 + $0x8] sm:$0xff]
  %v419 = vld [vmem:[%s3 + $0x10] sm:$0xff]
  %v420 = vld [vmem:[%s3 + $0x18] sm:$0xff]
  %v421 = vld [vmem:[%s3 + $0x20] sm:$0xff]
  %v422 = vld [vmem:[%s3 + $0x28] sm:$0xff]
  %v423 = vld [vmem:[%s3 + $0x30] sm:$0xff]
  %v424 = vld [vmem:[%s3 + $0x38] sm:$0xff]
  %v425 = vld [vmem:[%s4] sm:$0x1]
  %v427 = vlaneseq
  %v428 = vshrl.u32 %v427, 7
  %v429 = vsub.s32 0, %v428
  %v430 = vrot.slane %v425, %v429
  %vm432 = vcmask 523264
  %v434 = vsel %vm432, %v385, 0
  %v437 = vsel %vm432, %v386, 0
  %v440 = vsel %vm432, %v387, 0
  %v443 = vsel %vm432, %v388, 0
  %v446 = vsel %vm432, %v389, 0
  %v449 = vsel %vm432, %v390, 0
  %v452 = vsel %vm432, %v391, 0
  %v455 = vsel %vm432, %v392, 0
  %v458 = vsel %vm432, %v393, 0
  %v461 = vsel %vm432, %v394, 0
  %v464 = vsel %vm432, %v395, 0
  %v467 = vsel %vm432, %v396, 0
  %v470 = vsel %vm432, %v397, 0
  %v473 = vsel %vm432, %v398, 0
  %v476 = vsel %vm432, %v399, 0
  %v479 = vsel %vm432, %v400, 0
  %v482 = vsel %vm432, %v401, 0
  %v485 = vsel %vm432, %v402, 0
  %v488 = vsel %vm432, %v403, 0
  %v491 = vsel %vm432, %v404, 0
  %v494 = vsel %vm432, %v405, 0
  %v497 = vsel %vm432, %v406, 0
  %v500 = vsel %vm432, %v407, 0
  %v503 = vsel %vm432, %v408, 0
  %v506 = vsel %vm432, %v409, 0
  %v509 = vsel %vm432, %v410, 0
  %v512 = vsel %vm432, %v411, 0
  %v515 = vsel %vm432, %v412, 0
  %v518 = vsel %vm432, %v413, 0
  %v521 = vsel %vm432, %v414, 0
  %v524 = vsel %vm432, %v415, 0
  %v527 = vsel %vm432, %v416, 0
  %529 = vmatprep.subr.mxu0 0.0
  %530 = vmatpush1.msra.mxu0 %v417
  %531 = vmatprep.subr.mxu0 0.0
  %532 = vmatpush1.msra.mxu0 %v418
  %533 = vmatprep.subr.mxu0 0.0
  %534 = vmatpush1.msra.mxu0 %v419
  %535 = vmatprep.subr.mxu0 0.0
  %536 = vmatpush1.msra.mxu0 %v420
  %537 = vmatprep.subr.mxu0 0.0
  %538 = vmatpush1.msra.mxu0 %v421
  %539 = vmatprep.subr.mxu0 0.0
  %540 = vmatpush1.msra.mxu0 %v422
  %541 = vmatprep.subr.mxu0 0.0
  %542 = vmatpush1.msra.mxu0 %v423
  %543 = vmatprep.subr.mxu0 0.0
  %544 = vmatpush1.msra.mxu0 %v424
  %545 = vmatprep.subr.mxu0 0.0
  %546 = vmatpush1.msra.mxu0 0.0
  %547 = vmatprep.subr.mxu0 0.0
  %548 = vmatpush1.msra.mxu0 0.0
  %549 = vmatprep.subr.mxu0 0.0
  %550 = vmatpush1.msra.mxu0 0.0
  %551 = vmatprep.subr.mxu0 0.0
  %552 = vmatpush1.msra.mxu0 0.0
  %553 = vmatprep.subr.mxu0 0.0
  %554 = vmatpush1.msra.mxu0 0.0
  %555 = vmatprep.subr.mxu0 0.0
  %556 = vmatpush1.msra.mxu0 0.0
  %557 = vmatprep.subr.mxu0 0.0
  %558 = vmatpush1.msra.mxu0 0.0
  %559 = vmatprep.subr.mxu0 0.0
  %560 = vmatpush1.msra.mxu0 0.0
  %561 = vmatprep.subr.mxu0 0.0
  %562 = vmatpush1.msra.mxu0 0.0
  %563 = vmatprep.subr.mxu0 0.0
  %564 = vmatpush1.msra.mxu0 0.0
  %565 = vmatprep.subr.mxu0 0.0
  %566 = vmatpush1.msra.mxu0 0.0
  %567 = vmatprep.subr.mxu0 0.0
  %568 = vmatpush1.msra.mxu0 0.0
  %569 = vmatprep.subr.mxu0 0.0
  %570 = vmatpush1.msra.mxu0 0.0
  %571 = vmatprep.subr.mxu0 0.0
  %572 = vmatpush1.msra.mxu0 0.0
  %573 = vmatprep.subr.mxu0 0.0
  %574 = vmatpush1.msra.mxu0 0.0
  %575 = vmatprep.subr.mxu0 0.0
  %576 = vmatpush1.msra.mxu0 0.0
  %577 = vmatprep.subr.mxu0 0.0
  %578 = vmatpush1.msra.mxu0 0.0
  %579 = vmatprep.subr.mxu0 0.0
  %580 = vmatpush1.msra.mxu0 0.0
  %581 = vmatprep.subr.mxu0 0.0
  %582 = vmatpush1.msra.mxu0 0.0
  %583 = vmatprep.subr.mxu0 0.0
  %584 = vmatpush1.msra.mxu0 0.0
  %585 = vmatprep.subr.mxu0 0.0
  %586 = vmatpush1.msra.mxu0 0.0
  %587 = vmatprep.subr.mxu0 0.0
  %588 = vmatpush1.msra.mxu0 0.0
  %589 = vmatprep.subr.mxu0 0.0
  %590 = vmatpush1.msra.mxu0 0.0
  %591 = vmatprep.subr.mxu0 0.0
  %592 = vmatpush1.msra.mxu0 0.0
  %593 = vmatprep.mubr.f32.mxu0 0.0
  %594 = vmatmul.mubr.f32.gmra.mrb[0].mxu0 %v434
  %v595 = vpop.f32.mrb[0].mxu0
  %v596 = vadd.f32 %v430, %v595
  %v597 = vpop.f32.mrb[0].mxu0
  %598 = vmatprep.mubr.f32.mxu0 0.0
  %599 = vmatmul.mubr.f32.gmra.mrb[0].mxu0 %v437
  %v600 = vpop.f32.mrb[0].mxu0
  %v601 = vadd.f32 %v430, %v600
  %v602 = vpop.f32.mrb[0].mxu0
  %603 = vmatprep.mubr.f32.mxu0 0.0
  %604 = vmatmul.mubr.f32.gmra.mrb[0].mxu0 %v440
  %v605 = vpop.f32.mrb[0].mxu0
  %v606 = vadd.f32 %v430, %v605
  %v607 = vpop.f32.mrb[0].mxu0
  %608 = vmatprep.mubr.f32.mxu0 0.0
  %609 = vmatmul.mubr.f32.gmra.mrb[0].mxu0 %v443
  %v610 = vpop.f32.mrb[0].mxu0
  %v611 = vadd.f32 %v430, %v610
  %v612 = vpop.f32.mrb[0].mxu0
  %613 = vmatprep.mubr.f32.mxu0 0.0
  %614 = vmatmul.mubr.f32.gmra.mrb[0].mxu0 %v446
  %v615 = vpop.f32.mrb[0].mxu0
  %v616 = vadd.f32 %v430, %v615
  %v617 = vpop.f32.mrb[0].mxu0
  %618 = vmatprep.mubr.f32.mxu0 0.0
  %619 = vmatmul.mubr.f32.gmra.mrb[0].mxu0 %v449
  %v620 = vpop.f32.mrb[0].mxu0
  %v621 = vadd.f32 %v430, %v620
  %v622 = vpop.f32.mrb[0].mxu0
  %623 = vmatprep.mubr.f32.mxu0 0.0
  %624 = vmatmul.mubr.f32.gmra.mrb[0].mxu0 %v452
  %v625 = vpop.f32.mrb[0].mxu0
  %v626 = vadd.f32 %v430, %v625
  %v627 = vpop.f32.mrb[0].mxu0
  %628 = vmatprep.mubr.f32.mxu0 0.0
  %629 = vmatmul.mubr.f32.gmra.mrb[0].mxu0 %v455
  %v630 = vpop.f32.mrb[0].mxu0
  %v631 = vadd.f32 %v430, %v630
  %v632 = vpop.f32.mrb[0].mxu0
  %633 = vmatprep.mubr.f32.mxu0 0.0
  %634 = vmatmul.mubr.f32.gmra.mrb[0].mxu0 %v458
  %v635 = vpop.f32.mrb[0].mxu0
  %v636 = vadd.f32 %v430, %v635
  %v637 = vpop.f32.mrb[0].mxu0
  %638 = vmatprep.mubr.f32.mxu0 0.0
  %639 = vmatmul.mubr.f32.gmra.mrb[0].mxu0 %v461
  %v640 = vpop.f32.mrb[0].mxu0
  %v641 = vadd.f32 %v430, %v640
  %v642 = vpop.f32.mrb[0].mxu0
  %643 = vmatprep.mubr.f32.mxu0 0.0
  %644 = vmatmul.mubr.f32.gmra.mrb[0].mxu0 %v464
  %v645 = vpop.f32.mrb[0].mxu0
  %v646 = vadd.f32 %v430, %v645
  %v647 = vpop.f32.mrb[0].mxu0
  %648 = vmatprep.mubr.f32.mxu0 0.0
  %649 = vmatmul.mubr.f32.gmra.mrb[0].mxu0 %v467
  %v650 = vpop.f32.mrb[0].mxu0
  %v651 = vadd.f32 %v430, %v650
  %v652 = vpop.f32.mrb[0].mxu0
  %653 = vmatprep.mubr.f32.mxu0 0.0
  %654 = vmatmul.mubr.f32.gmra.mrb[0].mxu0 %v470
  %v655 = vpop.f32.mrb[0].mxu0
  %v656 = vadd.f32 %v430, %v655
  %v657 = vpop.f32.mrb[0].mxu0
  %658 = vmatprep.mubr.f32.mxu0 0.0
  %659 = vmatmul.mubr.f32.gmra.mrb[0].mxu0 %v473
  %v660 = vpop.f32.mrb[0].mxu0
  %v661 = vadd.f32 %v430, %v660
  %v662 = vpop.f32.mrb[0].mxu0
  %663 = vmatprep.mubr.f32.mxu0 0.0
  %664 = vmatmul.mubr.f32.gmra.mrb[0].mxu0 %v476
  %v665 = vpop.f32.mrb[0].mxu0
  %v666 = vadd.f32 %v430, %v665
  %v667 = vpop.f32.mrb[0].mxu0
  %668 = vmatprep.mubr.f32.mxu0 0.0
  %669 = vmatmul.mubr.f32.gmra.mrb[0].mxu0 %v479
  %v670 = vpop.f32.mrb[0].mxu0
  %v671 = vadd.f32 %v430, %v670
  %v672 = vpop.f32.mrb[0].mxu0
  %673 = vmatprep.mubr.f32.mxu0 0.0
  %674 = vmatmul.mubr.f32.gmra.mrb[0].mxu0 %v482
  %v675 = vpop.f32.mrb[0].mxu0
  %v676 = vadd.f32 %v430, %v675
  %v677 = vpop.f32.mrb[0].mxu0
  %678 = vmatprep.mubr.f32.mxu0 0.0
  %679 = vmatmul.mubr.f32.gmra.mrb[0].mxu0 %v485
  %v680 = vpop.f32.mrb[0].mxu0
  %v681 = vadd.f32 %v430, %v680
  %v682 = vpop.f32.mrb[0].mxu0
  %683 = vmatprep.mubr.f32.mxu0 0.0
  %684 = vmatmul.mubr.f32.gmra.mrb[0].mxu0 %v488
  %v685 = vpop.f32.mrb[0].mxu0
  %v686 = vadd.f32 %v430, %v685
  %v687 = vpop.f32.mrb[0].mxu0
  %688 = vmatprep.mubr.f32.mxu0 0.0
  %689 = vmatmul.mubr.f32.gmra.mrb[0].mxu0 %v491
  %v690 = vpop.f32.mrb[0].mxu0
  %v691 = vadd.f32 %v430, %v690
  %v692 = vpop.f32.mrb[0].mxu0
  %693 = vmatprep.mubr.f32.mxu0 0.0
  %694 = vmatmul.mubr.f32.gmra.mrb[0].mxu0 %v494
  %v695 = vpop.f32.mrb[0].mxu0
  %v696 = vadd.f32 %v430, %v695
  %v697 = vpop.f32.mrb[0].mxu0
  %698 = vmatprep.mubr.f32.mxu0 0.0
  %699 = vmatmul.mubr.f32.gmra.mrb[0].mxu0 %v497
  %v700 = vpop.f32.mrb[0].mxu0
  %v701 = vadd.f32 %v430, %v700
  %v702 = vpop.f32.mrb[0].mxu0
  %703 = vmatprep.mubr.f32.mxu0 0.0
  %704 = vmatmul.mubr.f32.gmra.mrb[0].mxu0 %v500
  %v705 = vpop.f32.mrb[0].mxu0
  %v706 = vadd.f32 %v430, %v705
  %v707 = vpop.f32.mrb[0].mxu0
  %708 = vmatprep.mubr.f32.mxu0 0.0
  %709 = vmatmul.mubr.f32.gmra.mrb[0].mxu0 %v503
  %v710 = vpop.f32.mrb[0].mxu0
  %v711 = vadd.f32 %v430, %v710
  %v712 = vpop.f32.mrb[0].mxu0
  %713 = vmatprep.mubr.f32.mxu0 0.0
  %714 = vmatmul.mubr.f32.gmra.mrb[0].mxu0 %v506
  %v715 = vpop.f32.mrb[0].mxu0
  %v716 = vadd.f32 %v430, %v715
  %v717 = vpop.f32.mrb[0].mxu0
  %718 = vmatprep.mubr.f32.mxu0 0.0
  %719 = vmatmul.mubr.f32.gmra.mrb[0].mxu0 %v509
  %v720 = vpop.f32.mrb[0].mxu0
  %v721 = vadd.f32 %v430, %v720
  %v722 = vpop.f32.mrb[0].mxu0
  %723 = vmatprep.mubr.f32.mxu0 0.0
  %724 = vmatmul.mubr.f32.gmra.mrb[0].mxu0 %v512
  %v725 = vpop.f32.mrb[0].mxu0
  %v726 = vadd.f32 %v430, %v725
  %v727 = vpop.f32.mrb[0].mxu0
  %728 = vmatprep.mubr.f32.mxu0 0.0
  %729 = vmatmul.mubr.f32.gmra.mrb[0].mxu0 %v515
  %v730 = vpop.f32.mrb[0].mxu0
  %v731 = vadd.f32 %v430, %v730
  %v732 = vpop.f32.mrb[0].mxu0
  %733 = vmatprep.mubr.f32.mxu0 0.0
  %734 = vmatmul.mubr.f32.gmra.mrb[0].mxu0 %v518
  %v735 = vpop.f32.mrb[0].mxu0
  %v736 = vadd.f32 %v430, %v735
  %v737 = vpop.f32.mrb[0].mxu0
  %738 = vmatprep.mubr.f32.mxu0 0.0
  %739 = vmatmul.mubr.f32.gmra.mrb[0].mxu0 %v521
  %v740 = vpop.f32.mrb[0].mxu0
  %v741 = vadd.f32 %v430, %v740
  %v742 = vpop.f32.mrb[0].mxu0
  %743 = vmatprep.mubr.f32.mxu0 0.0
  %744 = vmatmul.mubr.f32.gmra.mrb[0].mxu0 %v524
  %v745 = vpop.f32.mrb[0].mxu0
  %v746 = vadd.f32 %v430, %v745
  %v747 = vpop.f32.mrb[0].mxu0
  %748 = vmatprep.mubr.f32.mxu0 0.0
  %749 = vmatmul.mubr.f32.gmra.mrb[0].mxu0 %v527
  %v750 = vpop.f32.mrb[0].mxu0
  %v751 = vadd.f32 %v430, %v750
  %v752 = vpop.f32.mrb[0].mxu0
  %753 = vdwg.mxu0
  %vm754 = vcmask 130048
  %755 = vst.msk [vmem:[%s5] sm:$0xff] %vm754, %v596
  %756 = vst.msk [vmem:[%s5 + $0x8] sm:$0xff] %vm754, %v601
  %757 = vst.msk [vmem:[%s5 + $0x10] sm:$0xff] %vm754, %v606
  %758 = vst.msk [vmem:[%s5 + $0x18] sm:$0xff] %vm754, %v611
  %759 = vst.msk [vmem:[%s5 + $0x20] sm:$0xff] %vm754, %v616
  %760 = vst.msk [vmem:[%s5 + $0x28] sm:$0xff] %vm754, %v621
  %761 = vst.msk [vmem:[%s5 + $0x30] sm:$0xff] %vm754, %v626
  %762 = vst.msk [vmem:[%s5 + $0x38] sm:$0xff] %vm754, %v631
  %763 = vst.msk [vmem:[%s5 + $0x40] sm:$0xff] %vm754, %v636
  %764 = vst.msk [vmem:[%s5 + $0x48] sm:$0xff] %vm754, %v641
  %765 = vst.msk [vmem:[%s5 + $0x50] sm:$0xff] %vm754, %v646
  %766 = vst.msk [vmem:[%s5 + $0x58] sm:$0xff] %vm754, %v651
  %767 = vst.msk [vmem:[%s5 + $0x60] sm:$0xff] %vm754, %v656
  %768 = vst.msk [vmem:[%s5 + $0x68] sm:$0xff] %vm754, %v661
  %769 = vst.msk [vmem:[%s5 + $0x70] sm:$0xff] %vm754, %v666
  %770 = vst.msk [vmem:[%s5 + $0x78] sm:$0xff] %vm754, %v671
  %771 = vst.msk [vmem:[%s5 + $0x80] sm:$0xff] %vm754, %v676
  %772 = vst.msk [vmem:[%s5 + $0x88] sm:$0xff] %vm754, %v681
  %773 = vst.msk [vmem:[%s5 + $0x90] sm:$0xff] %vm754, %v686
  %774 = vst.msk [vmem:[%s5 + $0x98] sm:$0xff] %vm754, %v691
  %775 = vst.msk [vmem:[%s5 + $0xa0] sm:$0xff] %vm754, %v696
  %776 = vst.msk [vmem:[%s5 + $0xa8] sm:$0xff] %vm754, %v701
  %777 = vst.msk [vmem:[%s5 + $0xb0] sm:$0xff] %vm754, %v706
  %778 = vst.msk [vmem:[%s5 + $0xb8] sm:$0xff] %vm754, %v711
  %779 = vst.msk [vmem:[%s5 + $0xc0] sm:$0xff] %vm754, %v716
  %780 = vst.msk [vmem:[%s5 + $0xc8] sm:$0xff] %vm754, %v721
  %781 = vst.msk [vmem:[%s5 + $0xd0] sm:$0xff] %vm754, %v726
  %782 = vst.msk [vmem:[%s5 + $0xd8] sm:$0xff] %vm754, %v731
  %783 = vst.msk [vmem:[%s5 + $0xe0] sm:$0xff] %vm754, %v736
  %784 = vst.msk [vmem:[%s5 + $0xe8] sm:$0xff] %vm754, %v741
  %785 = vst.msk [vmem:[%s5 + $0xf0] sm:$0xff] %vm754, %v746
  %786 = vst.msk [vmem:[%s5 + $0xf8] sm:$0xff] %vm754, %v751
  // Predicated region
  $region22: #{tpu_custom_call.1} parent=0 // pred_check
    _
  $region23: #{tpu_custom_call.1} parent=0 // pred_check_branch
    %788 = sbr.rel (0) target = $region25
  $region24: #{tpu_custom_call.1} parent=0 // pred_region
    _
  $region25: #{tpu_custom_call.1} parent=0 // pred_fallthru
    _
  // Predicated region
  $region26: #{tpu_custom_call.1} parent=0 // pred_check
    _
  $region27: #{tpu_custom_call.1} parent=0 // pred_check_branch
    %790 = sbr.rel (0) target = $region29
  $region28: #{tpu_custom_call.1} parent=0 // pred_region
    _
  $region29: #{tpu_custom_call.1} parent=0 // pred_fallthru
    _

</llo_original>
